<compile_context>
chip_gen: v7x
topology: tpu7x:2x2x1
jax: 0.10.0
libtpu: 0.0.40
codegen_flags: <defaults>
</compile_context>

<pallas_src>
import jax
import jax.numpy as jnp
import numpy as np
from jax.experimental import pallas as pl
from jax.experimental.pallas import tpu as pltpu


def _round_up(x, m):
    return ((x + m - 1) // m) * m


def _pad2d(a, rows, cols):
    r, c = a.shape
    if r == rows and c == cols:
        return a
    return jnp.pad(a, ((0, rows - r), (0, cols - c)))


# --------------------------------------------------------------------------
# Kernel 1: encoder reduction over n_items tiles + mu/logvar heads + decoder
#           hidden layer.  grid = (batch_tiles, k_tiles), k is the reduction.
# --------------------------------------------------------------------------
def _encoder_kernel(x_ref, wq0_ref, bq0_ref,
                    wq1m_ref, bq1m_ref, wq1v_ref, bq1v_ref,
                    wp0_ref, bp0_ref,
                    mu_ref, logvar_ref, dhid_ref,
                    acc_ref):
    k = pl.program_id(1)

    @pl.when(k == 0)
    def _():
        acc_ref[...] = jnp.zeros_like(acc_ref)

    # Streamed MXU reduction: (TB, TK) @ (TK, H) accumulated in f32.
    acc_ref[...] += jnp.dot(x_ref[...], wq0_ref[...],
                            preferred_element_type=jnp.float32)

    @pl.when(k == pl.num_programs(1) - 1)
    def _():
        # Bias add + tanh only once, in the finalize branch (f32 VPU/EUP).
        h1 = jnp.tanh(acc_ref[...] + bq0_ref[...])            # (TB, H) f32
        h1c = h1.astype(wq1m_ref.dtype)

        mu = jnp.dot(h1c, wq1m_ref[...],
                     preferred_element_type=jnp.float32) + bq1m_ref[...]
        logvar = jnp.dot(h1c, wq1v_ref[...],
                         preferred_element_type=jnp.float32) + bq1v_ref[...]
        mu_ref[...] = mu                                      # lane-dense (TB, L)
        logvar_ref[...] = logvar

        # Eval-mode reparameterize: z = mu.
        z = mu.astype(wp0_ref.dtype)
        d = jnp.tanh(jnp.dot(z, wp0_ref[...],
                             preferred_element_type=jnp.float32) + bp0_ref[...])
        dhid_ref[...] = d.astype(dhid_ref.dtype)


# --------------------------------------------------------------------------
# Kernel 2: recon = d @ Wp1 + bp1, output columns tiled over n_items.
#           grid = (n_tiles, batch_tiles): wp1 tile reused across batch tiles.
# --------------------------------------------------------------------------
def _decoder_kernel(dhid_ref, wp1_ref, bp1_ref, recon_ref):
    recon_ref[...] = (jnp.dot(dhid_ref[...], wp1_ref[...],
                              preferred_element_type=jnp.float32)
                      + bp1_ref[...]).astype(recon_ref.dtype)


def multivae_forward(x, params, *, compute_dtype=jnp.bfloat16,
                     tile_b=256, tile_k=512, tile_n=1024):
    """Fused MultiVAE forward (eval mode).  Returns (recon, mu, logvar) f32."""
    B, n_items = x.shape
    hidden = params["wq0"].shape[1]
    latent = params["wp0"].shape[0]
    assert params["wq1"].shape[1] == 2 * latent

    f32 = jnp.float32
    cdt = jnp.dtype(compute_dtype)
    itemsize = np.dtype(cdt).itemsize

    # Padded / tiled dims (lane dims -> multiples of 128, sublane -> 8).
    H = _round_up(hidden, 128)
    L = _round_up(latent, 128)
    TB = min(tile_b, _round_up(B, 8))
    Bp = _round_up(B, TB)
    TK = min(tile_k, _round_up(n_items, 128))
    Kp = _round_up(n_items, TK)
    TN = min(tile_n, _round_up(n_items, 128))
    Np = _round_up(n_items, TN)

    # Big streamed operands in compute dtype; biases stay f32 (they are added
    # to f32 accumulators).  Zero padding keeps the math exact.
    x_p = _pad2d(x, Bp, Kp).astype(cdt)
    wq0 = _pad2d(params["wq0"], Kp, H).astype(cdt)
    bq0 = _pad2d(params["bq0"], 1, H).astype(f32)
    wq1m = _pad2d(params["wq1"][:, :latent], H, L).astype(cdt)   # mu head
    wq1v = _pad2d(params["wq1"][:, latent:], H, L).astype(cdt)   # logvar head
    bq1m = _pad2d(params["bq1"][:, :latent], 1, L).astype(f32)
    bq1v = _pad2d(params["bq1"][:, latent:], 1, L).astype(f32)
    wp0 = _pad2d(params["wp0"], L, H).astype(cdt)
    bp0 = _pad2d(params["bp0"], 1, H).astype(f32)
    wp1 = _pad2d(params["wp1"], H, Np).astype(cdt)
    bp1 = _pad2d(params["bp1"], 1, Np).astype(f32)

    nb = Bp // TB
    nk = Kp // TK
    nn_ = Np // TN

    # ---------------- kernel 1: encoder + heads + decoder hidden ----------
    enc_cost = pl.CostEstimate(
        flops=2 * Bp * Kp * H + 2 * 2 * Bp * H * L + 2 * Bp * L * H,
        transcendentals=2 * Bp * H,
        bytes_accessed=(x_p.size + wq0.size + wq1m.size + wq1v.size
                        + wp0.size) * itemsize
                       + (bq0.size + bq1m.size + bq1v.size + bp0.size) * 4
                       + 2 * Bp * L * 4 + Bp * H * itemsize)

    mu_p, logvar_p, dhid = pl.pallas_call(
        _encoder_kernel,
        out_shape=(jax.ShapeDtypeStruct((Bp, L), f32),
                   jax.ShapeDtypeStruct((Bp, L), f32),
                   jax.ShapeDtypeStruct((Bp, H), cdt)),
        grid_spec=pltpu.PrefetchScalarGridSpec(
            num_scalar_prefetch=0,
            grid=(nb, nk),
            in_specs=[
                pl.BlockSpec((TB, TK), lambda b, k: (b, k)),   # x tile
                pl.BlockSpec((TK, H), lambda b, k: (k, 0)),    # wq0 tile (streamed)
                pl.BlockSpec((1, H), lambda b, k: (0, 0)),     # bq0 (resident)
                pl.BlockSpec((H, L), lambda b, k: (0, 0)),     # wq1 mu head
                pl.BlockSpec((1, L), lambda b, k: (0, 0)),     # bq1 mu head
                pl.BlockSpec((H, L), lambda b, k: (0, 0)),     # wq1 logvar head
                pl.BlockSpec((1, L), lambda b, k: (0, 0)),     # bq1 logvar head
                pl.BlockSpec((L, H), lambda b, k: (0, 0)),     # wp0 (resident)
                pl.BlockSpec((1, H), lambda b, k: (0, 0)),     # bp0 (resident)
            ],
            out_specs=[
                pl.BlockSpec((TB, L), lambda b, k: (b, 0)),    # mu
                pl.BlockSpec((TB, L), lambda b, k: (b, 0)),    # logvar
                pl.BlockSpec((TB, H), lambda b, k: (b, 0)),    # decoder hidden
            ],
            scratch_shapes=[pltpu.VMEM((TB, H), jnp.float32)],
        ),
        compiler_params=pltpu.CompilerParams(
            dimension_semantics=("parallel", "arbitrary"),
            vmem_limit_bytes=32 << 20,   # working set ~6 MiB; safe on v5e/v6e/v7x
        ),
        cost_estimate=enc_cost,
    )(x_p, wq0, bq0, wq1m, bq1m, wq1v, bq1v, wp0, bp0)

    # ---------------- kernel 2: decoder output matmul ----------------------
    dec_cost = pl.CostEstimate(
        flops=2 * Bp * H * Np,
        transcendentals=0,
        bytes_accessed=(dhid.size + wp1.size) * itemsize
                       + bp1.size * 4 + Bp * Np * 4)

    recon_p = pl.pallas_call(
        _decoder_kernel,
        out_shape=jax.ShapeDtypeStruct((Bp, Np), f32),
        grid_spec=pltpu.PrefetchScalarGridSpec(
            num_scalar_prefetch=0,
            grid=(nn_, nb),   # n outer, b inner -> wp1 tile fetched once per n
            in_specs=[
                pl.BlockSpec((TB, H), lambda n, b: (b, 0)),    # decoder hidden
                pl.BlockSpec((H, TN), lambda n, b: (0, n)),    # wp1 tile (streamed)
                pl.BlockSpec((1, TN), lambda n, b: (0, n)),    # bp1 tile
            ],
            out_specs=pl.BlockSpec((TB, TN), lambda n, b: (b, n)),
        ),
        compiler_params=pltpu.CompilerParams(
            dimension_semantics=("parallel", "parallel"),
            vmem_limit_bytes=32 << 20,
        ),
        cost_estimate=dec_cost,
    )(dhid, wp1, bp1)

    # Un-pad to the module's logical shapes.
    recon = recon_p[:B, :n_items]
    mu = mu_p[:B, :latent]
    logvar = logvar_p[:B, :latent]
    return recon, mu, logvar


def init_multivae_params(key, p_dims):
    """Deterministic init matching MultiVAE.init_weights().

    p_dims = [latent, hidden, n_items]; q_dims = p_dims[::-1];
    temp_q_dims = [n_items, hidden, 2*latent].
    Weights stored transposed relative to PyTorch: shape (d_in, d_out).
    """
    latent, hidden, n_items = p_dims
    q_dims = p_dims[::-1]
    temp_q_dims = q_dims[:-1] + [q_dims[-1] * 2]

    def linear(key, d_in, d_out):
        kw, kb = jax.random.split(key)
        std = np.sqrt(2.0 / (d_in + d_out))
        w = jax.random.normal(kw, (d_in, d_out), jnp.float32) * std
        b = jax.random.normal(kb, (1, d_out), jnp.float32) * 0.001
        return w, b

    keys = jax.random.split(key, 4)
    wq0, bq0 = linear(keys[0], temp_q_dims[0], temp_q_dims[1])  # n_items -> hidden
    wq1, bq1 = linear(keys[1], temp_q_dims[1], temp_q_dims[2])  # hidden -> 2*latent
    wp0, bp0 = linear(keys[2], p_dims[0], p_dims[1])            # latent -> hidden
    wp1, bp1 = linear(keys[3], p_dims[1], p_dims[2])            # hidden -> n_items

    return dict(wq0=wq0, bq0=bq0, wq1=wq1, bq1=bq1,
                wp0=wp0, bp0=bp0, wp1=wp1, bp1=bp1)


def multivae_reference(x, params):
    """Pure-JAX f32 reference for correctness checking."""
    latent = params["wp0"].shape[0]
    h = jnp.tanh(x @ params["wq0"] + params["bq0"])
    h = h @ params["wq1"] + params["bq1"]
    mu, logvar = h[:, :latent], h[:, latent:]
    z = mu                                  # eval-mode reparameterize
    d = jnp.tanh(z @ params["wp0"] + params["bp0"])
    recon = d @ params["wp1"] + params["bp1"]
    return recon, mu, logvar


if __name__ == "__main__":
    # Small, forward-consistent shapes: p_dims = [latent, hidden, n_items]
    p_dims = [8, 32, 64]
    batch = 8

    key = jax.random.PRNGKey(0)
    k_params, k_x = jax.random.split(key)
    params = init_multivae_params(k_params, p_dims)

    # Input is a (binarized) user-item interaction matrix: (B, n_items)
    x = (jax.random.uniform(k_x, (batch, p_dims[-1]), jnp.float32) > 0.5
         ).astype(jnp.float32)

    recon_r, mu_r, logvar_r = multivae_reference(x, params)

    # f32 compute path (tight check).
    recon, mu, logvar = jax.block_until_ready(
        multivae_forward(x, params, compute_dtype=jnp.float32))
    assert jnp.allclose(recon, recon_r, atol=1e-4, rtol=1e-4)
    assert jnp.allclose(mu, mu_r, atol=1e-4, rtol=1e-4)
    assert jnp.allclose(logvar, logvar_r, atol=1e-4, rtol=1e-4)

    # Default bf16-streamed path (f32 MXU accumulation) -- loose check vs f32 ref.
    recon_b, mu_b, logvar_b = jax.block_until_ready(multivae_forward(x, params))
    assert jnp.allclose(recon_b, recon_r, atol=5e-2, rtol=5e-2)
    assert jnp.allclose(mu_b, mu_r, atol=5e-2, rtol=5e-2)
    assert jnp.allclose(logvar_b, logvar_r, atol=5e-2, rtol=5e-2)

    print("KERNEL_OK")
</pallas_src>

<mosaic_0001>
module attributes {stable_mosaic.version = 11 : i64} {
  func.func @_encoder_kernel(%arg0: i32, %arg1: i32, %arg2: memref<8x128xf32, #tpu.memory_space<vmem>>, %arg3: memref<128x128xf32, #tpu.memory_space<vmem>>, %arg4: memref<1x128xf32, #tpu.memory_space<vmem>>, %arg5: memref<128x128xf32, #tpu.memory_space<vmem>>, %arg6: memref<1x128xf32, #tpu.memory_space<vmem>>, %arg7: memref<128x128xf32, #tpu.memory_space<vmem>>, %arg8: memref<1x128xf32, #tpu.memory_space<vmem>>, %arg9: memref<128x128xf32, #tpu.memory_space<vmem>>, %arg10: memref<1x128xf32, #tpu.memory_space<vmem>>, %arg11: memref<8x128xf32, #tpu.memory_space<vmem>>, %arg12: memref<8x128xf32, #tpu.memory_space<vmem>>, %arg13: memref<8x128xf32, #tpu.memory_space<vmem>>, %arg14: memref<8x128xf32, #tpu.memory_space<vmem>>) attributes {dimension_semantics = [#tpu.dimension_semantics<parallel>, #tpu.dimension_semantics<arbitrary>], iteration_bounds = array<i64: 1, 1>, scalar_prefetch = 0 : i64, scratch_operands = 1 : i64, tpu.core_type = #tpu.core_type<tc>, window_params = [{transform_indices = @transform_0, window_bounds = array<i64: 8, 128>}, {transform_indices = @transform_1, window_bounds = array<i64: 128, 128>}, {pipeline_mode = #tpu.pipeline_mode<synchronous>, transform_indices = @transform_2, window_bounds = array<i64: 1, 128>}, {pipeline_mode = #tpu.pipeline_mode<synchronous>, transform_indices = @transform_3, window_bounds = array<i64: 128, 128>}, {pipeline_mode = #tpu.pipeline_mode<synchronous>, transform_indices = @transform_4, window_bounds = array<i64: 1, 128>}, {pipeline_mode = #tpu.pipeline_mode<synchronous>, transform_indices = @transform_5, window_bounds = array<i64: 128, 128>}, {pipeline_mode = #tpu.pipeline_mode<synchronous>, transform_indices = @transform_6, window_bounds = array<i64: 1, 128>}, {pipeline_mode = #tpu.pipeline_mode<synchronous>, transform_indices = @transform_7, window_bounds = array<i64: 128, 128>}, {pipeline_mode = #tpu.pipeline_mode<synchronous>, transform_indices = @transform_8, window_bounds = array<i64: 1, 128>}, {transform_indices = @transform_9, window_bounds = array<i64: 8, 128>}, {transform_indices = @transform_10, window_bounds = array<i64: 8, 128>}, {transform_indices = @transform_11, window_bounds = array<i64: 8, 128>}]} {
    %c0_i32 = arith.constant 0 : i32
    %0 = arith.cmpi eq, %arg1, %c0_i32 : i32
    %1 = arith.extui %0 : i1 to i32
    %c0_i32_0 = arith.constant 0 : i32
    %2 = arith.cmpi ne, %1, %c0_i32_0 : i32
    scf.if %2 {
      %cst_10 = arith.constant 0.000000e+00 : f32
      %12 = vector.broadcast %cst_10 : f32 to vector<8x128xf32>
      %c0_11 = arith.constant 0 : index
      %c0_12 = arith.constant 0 : index
      %13 = vector.load %arg14[%c0_11, %c0_12] : memref<8x128xf32, #tpu.memory_space<vmem>>, vector<8x128xf32>
      tpu.vector_store %arg14[%c0_11, %c0_12], %12 {strides = array<i32>} : memref<8x128xf32, #tpu.memory_space<vmem>>, vector<8x128xf32>,
    } else {
    }
    %c0 = arith.constant 0 : index
    %c0_1 = arith.constant 0 : index
    %3 = vector.load %arg14[%c0, %c0_1] : memref<8x128xf32, #tpu.memory_space<vmem>>, vector<8x128xf32>
    %c0_2 = arith.constant 0 : index
    %c0_3 = arith.constant 0 : index
    %4 = vector.load %arg2[%c0_2, %c0_3] : memref<8x128xf32, #tpu.memory_space<vmem>>, vector<8x128xf32>
    %c0_4 = arith.constant 0 : index
    %c0_5 = arith.constant 0 : index
    %5 = vector.load %arg3[%c0_4, %c0_5] : memref<128x128xf32, #tpu.memory_space<vmem>>, vector<128x128xf32>
    %cst = arith.constant dense<0.000000e+00> : vector<8x128xf32>
    %6 = tpu.matmul %4, %5, %cst {dimension_numbers = #tpu.dot_dimension_numbers<[1], [0], [0], [1], [0, 0, 1, 1], [], []>} : vector<8x128xf32>, vector<128x128xf32>, vector<8x128xf32> -> vector<8x128xf32>
    %7 = arith.addf %3, %6 : vector<8x128xf32>
    %c0_6 = arith.constant 0 : index
    %c0_7 = arith.constant 0 : index
    %8 = vector.load %arg14[%c0_6, %c0_7] : memref<8x128xf32, #tpu.memory_space<vmem>>, vector<8x128xf32>
    tpu.vector_store %arg14[%c0_6, %c0_7], %7 {strides = array<i32>} : memref<8x128xf32, #tpu.memory_space<vmem>>, vector<8x128xf32>,
    %c0_i32_8 = arith.constant 0 : i32
    %9 = arith.cmpi eq, %arg1, %c0_i32_8 : i32
    %10 = arith.extui %9 : i1 to i32
    %c0_i32_9 = arith.constant 0 : i32
    %11 = arith.cmpi ne, %10, %c0_i32_9 : i32
    scf.if %11 {
      %c0_10 = arith.constant 0 : index
      %c0_11 = arith.constant 0 : index
      %12 = vector.load %arg14[%c0_10, %c0_11] : memref<8x128xf32, #tpu.memory_space<vmem>>, vector<8x128xf32>
      %c0_12 = arith.constant 0 : index
      %c0_13 = arith.constant 0 : index
      %13 = vector.load %arg4[%c0_12, %c0_13] : memref<1x128xf32, #tpu.memory_space<vmem>>, vector<1x128xf32>
      %14 = vector.broadcast %13 : vector<1x128xf32> to vector<8x128xf32>
      %15 = arith.addf %12, %14 : vector<8x128xf32>
      %16 = math.tanh %15 : vector<8x128xf32>
      %c0_14 = arith.constant 0 : index
      %c0_15 = arith.constant 0 : index
      %17 = vector.load %arg5[%c0_14, %c0_15] : memref<128x128xf32, #tpu.memory_space<vmem>>, vector<128x128xf32>
      %cst_16 = arith.constant dense<0.000000e+00> : vector<8x128xf32>
      %18 = tpu.matmul %16, %17, %cst_16 {dimension_numbers = #tpu.dot_dimension_numbers<[1], [0], [0], [1], [0, 0, 1, 1], [], []>} : vector<8x128xf32>, vector<128x128xf32>, vector<8x128xf32> -> vector<8x128xf32>
      %c0_17 = arith.constant 0 : index
      %c0_18 = arith.constant 0 : index
      %19 = vector.load %arg6[%c0_17, %c0_18] : memref<1x128xf32, #tpu.memory_space<vmem>>, vector<1x128xf32>
      %20 = vector.broadcast %19 : vector<1x128xf32> to vector<8x128xf32>
      %21 = arith.addf %18, %20 : vector<8x128xf32>
      %c0_19 = arith.constant 0 : index
      %c0_20 = arith.constant 0 : index
      %22 = vector.load %arg7[%c0_19, %c0_20] : memref<128x128xf32, #tpu.memory_space<vmem>>, vector<128x128xf32>
      %cst_21 = arith.constant dense<0.000000e+00> : vector<8x128xf32>
      %23 = tpu.matmul %16, %22, %cst_21 {dimension_numbers = #tpu.dot_dimension_numbers<[1], [0], [0], [1], [0, 0, 1, 1], [], []>} : vector<8x128xf32>, vector<128x128xf32>, vector<8x128xf32> -> vector<8x128xf32>
      %c0_22 = arith.constant 0 : index
      %c0_23 = arith.constant 0 : index
      %24 = vector.load %arg8[%c0_22, %c0_23] : memref<1x128xf32, #tpu.memory_space<vmem>>, vector<1x128xf32>
      %25 = vector.broadcast %24 : vector<1x128xf32> to vector<8x128xf32>
      %26 = arith.addf %23, %25 : vector<8x128xf32>
      %c0_24 = arith.constant 0 : index
      %c0_25 = arith.constant 0 : index
      %27 = vector.load %arg11[%c0_24, %c0_25] : memref<8x128xf32, #tpu.memory_space<vmem>>, vector<8x128xf32>
      tpu.vector_store %arg11[%c0_24, %c0_25], %21 {strides = array<i32>} : memref<8x128xf32, #tpu.memory_space<vmem>>, vector<8x128xf32>,
      %c0_26 = arith.constant 0 : index
      %c0_27 = arith.constant 0 : index
      %28 = vector.load %arg12[%c0_26, %c0_27] : memref<8x128xf32, #tpu.memory_space<vmem>>, vector<8x128xf32>
      tpu.vector_store %arg12[%c0_26, %c0_27], %26 {strides = array<i32>} : memref<8x128xf32, #tpu.memory_space<vmem>>, vector<8x128xf32>,
      %c0_28 = arith.constant 0 : index
      %c0_29 = arith.constant 0 : index
      %29 = vector.load %arg9[%c0_28, %c0_29] : memref<128x128xf32, #tpu.memory_space<vmem>>, vector<128x128xf32>
      %cst_30 = arith.constant dense<0.000000e+00> : vector<8x128xf32>
      %30 = tpu.matmul %21, %29, %cst_30 {dimension_numbers = #tpu.dot_dimension_numbers<[1], [0], [0], [1], [0, 0, 1, 1], [], []>} : vector<8x128xf32>, vector<128x128xf32>, vector<8x128xf32> -> vector<8x128xf32>
      %c0_31 = arith.constant 0 : index
      %c0_32 = arith.constant 0 : index
      %31 = vector.load %arg10[%c0_31, %c0_32] : memref<1x128xf32, #tpu.memory_space<vmem>>, vector<1x128xf32>
      %32 = vector.broadcast %31 : vector<1x128xf32> to vector<8x128xf32>
      %33 = arith.addf %30, %32 : vector<8x128xf32>
      %34 = math.tanh %33 : vector<8x128xf32>
      %c0_33 = arith.constant 0 : index
      %c0_34 = arith.constant 0 : index
      %35 = vector.load %arg13[%c0_33, %c0_34] : memref<8x128xf32, #tpu.memory_space<vmem>>, vector<8x128xf32>
      tpu.vector_store %arg13[%c0_33, %c0_34], %34 {strides = array<i32>} : memref<8x128xf32, #tpu.memory_space<vmem>>, vector<8x128xf32>,
    } else {
    }
    return
  }
  func.func @transform_0(%arg0: i32, %arg1: i32) -> (i32, i32) {
    %c0_i32 = arith.constant 0 : i32
    return %arg0, %arg1 : i32, i32
  }
  func.func @transform_1(%arg0: i32, %arg1: i32) -> (i32, i32) {
    %c0_i32 = arith.constant 0 : i32
    %c0_i32_0 = arith.constant 0 : i32
    return %arg1, %c0_i32 : i32, i32
  }
  func.func @transform_2(%arg0: i32, %arg1: i32) -> (i32, i32) {
    %c0_i32 = arith.constant 0 : i32
    %c0_i32_0 = arith.constant 0 : i32
    %c0_i32_1 = arith.constant 0 : i32
    return %c0_i32, %c0_i32_0 : i32, i32
  }
  func.func @transform_3(%arg0: i32, %arg1: i32) -> (i32, i32) {
    %c0_i32 = arith.constant 0 : i32
    %c0_i32_0 = arith.constant 0 : i32
    %c0_i32_1 = arith.constant 0 : i32
    return %c0_i32, %c0_i32_0 : i32, i32
  }
  func.func @transform_4(%arg0: i32, %arg1: i32) -> (i32, i32) {
    %c0_i32 = arith.constant 0 : i32
    %c0_i32_0 = arith.constant 0 : i32
    %c0_i32_1 = arith.constant 0 : i32
    return %c0_i32, %c0_i32_0 : i32, i32
  }
  func.func @transform_5(%arg0: i32, %arg1: i32) -> (i32, i32) {
    %c0_i32 = arith.constant 0 : i32
    %c0_i32_0 = arith.constant 0 : i32
    %c0_i32_1 = arith.constant 0 : i32
    return %c0_i32, %c0_i32_0 : i32, i32
  }
  func.func @transform_6(%arg0: i32, %arg1: i32) -> (i32, i32) {
    %c0_i32 = arith.constant 0 : i32
    %c0_i32_0 = arith.constant 0 : i32
    %c0_i32_1 = arith.constant 0 : i32
    return %c0_i32, %c0_i32_0 : i32, i32
  }
  func.func @transform_7(%arg0: i32, %arg1: i32) -> (i32, i32) {
    %c0_i32 = arith.constant 0 : i32
    %c0_i32_0 = arith.constant 0 : i32
    %c0_i32_1 = arith.constant 0 : i32
    return %c0_i32, %c0_i32_0 : i32, i32
  }
  func.func @transform_8(%arg0: i32, %arg1: i32) -> (i32, i32) {
    %c0_i32 = arith.constant 0 : i32
    %c0_i32_0 = arith.constant 0 : i32
    %c0_i32_1 = arith.constant 0 : i32
    return %c0_i32, %c0_i32_0 : i32, i32
  }
  func.func @transform_9(%arg0: i32, %arg1: i32) -> (i32, i32) {
    %c0_i32 = arith.constant 0 : i32
    %c0_i32_0 = arith.constant 0 : i32
    return %arg0, %c0_i32 : i32, i32
  }
  func.func @transform_10(%arg0: i32, %arg1: i32) -> (i32, i32) {
    %c0_i32 = arith.constant 0 : i32
    %c0_i32_0 = arith.constant 0 : i32
    return %arg0, %c0_i32 : i32, i32
  }
  func.func @transform_11(%arg0: i32, %arg1: i32) -> (i32, i32) {
    %c0_i32 = arith.constant 0 : i32
    %c0_i32_0 = arith.constant 0 : i32
    return %arg0, %c0_i32 : i32, i32
  }
}

</mosaic_0001>

<llo_original>
// kernel: tpu_custom_call.1
$region0: #{tpu_custom_call.1}
  #allocation0 [shape = 'u32[]', space=smem, size = 0x4, offset = 0x4, fixed_abs, tag = 'smem constant byte address 0x4 - core index']
  #allocation1 [shape = 'u32[144,128]{1,0:T(1,128)}', space=vmem, size = 0x12000, scoped, tag = 'internal scratch']
  #allocation2 [shape = 'f32[8,128]{1,0:T(8,128)}', space=vmem, size = 0x1000, scoped, tag = 'scratch operand']
  %s0 = inlined_call_operand.hbm [shape: f32[8,128], index: 0, kind: input, shape index: {}]
  %s1 = inlined_call_operand.hbm [shape: f32[128,128], index: 1, kind: input, shape index: {}]
  %s2 = inlined_call_operand.vmem [shape: f32[1,128], index: 2, kind: input, shape index: {}]
  %s3 = inlined_call_operand.hbm [shape: f32[128,128], index: 3, kind: input, shape index: {}]
  %s4 = inlined_call_operand.vmem [shape: f32[1,128], index: 4, kind: input, shape index: {}]
  %s5 = inlined_call_operand.hbm [shape: f32[128,128], index: 5, kind: input, shape index: {}]
  %s6 = inlined_call_operand.vmem [shape: f32[1,128], index: 6, kind: input, shape index: {}]
  %s7 = inlined_call_operand.hbm [shape: f32[128,128], index: 7, kind: input, shape index: {}]
  %s8 = inlined_call_operand.vmem [shape: f32[1,128], index: 8, kind: input, shape index: {}]
  %s9 = inlined_call_operand.hbm [shape: f32[8,128], index: 9, kind: output, shape index: {0}]
  %s10 = inlined_call_operand.hbm [shape: f32[8,128], index: 10, kind: output, shape index: {1}]
  %s11 = inlined_call_operand.hbm [shape: f32[8,128], index: 11, kind: output, shape index: {2}]
  %12 = xla_tuple %s9, %s10, %s11
  %s13 = sld [smem:[#allocation0]]
  $region90: #{tpu_custom_call.1} parent=0
    _
  %s15 = ssub.s32 1, %s13
  %s16 = scalar_select 0, %s15, %s13
  $region1: #{tpu_custom_call.1} parent=0
    #allocation3 [shape = 'u8[4096]{0}', space=vmem, size = 0x1000, scoped, tag = 'input window, operand 0, single buffered']
    #allocation4 [shape = 's32[1]{0}', space=sflag, size = 0x4, scoped, tag = 'scoped memory for tpu_custom_call.1']
    #allocation5 [shape = 's32[1]{0}', space=sflag, size = 0x4, scoped, tag = 'scoped memory for tpu_custom_call.1']
    #allocation6 [shape = 'u8[65536]{0}', space=vmem, size = 0x10000, scoped, tag = 'input window, operand 1, single buffered']
    #allocation7 [shape = 's32[1]{0}', space=sflag, size = 0x4, scoped, tag = 'scoped memory for tpu_custom_call.1']
    #allocation8 [shape = 'u8[65536]{0}', space=vmem, size = 0x10000, scoped, tag = 'input window, operand 3, single buffered']
    #allocation9 [shape = 'u8[65536]{0}', space=vmem, size = 0x10000, scoped, tag = 'input window, operand 5, single buffered']
    #allocation10 [shape = 's32[1]{0}', space=sflag, size = 0x4, scoped, tag = 'scoped memory for tpu_custom_call.1']
    #allocation11 [shape = 'u8[65536]{0}', space=vmem, size = 0x10000, scoped, tag = 'input window, operand 7, single buffered']
    #allocation12 [shape = 'u8[4096]{0}', space=vmem, size = 0x1000, scoped, tag = 'output window, operand 0, single buffered']
    #allocation13 [shape = 'u8[4096]{0}', space=vmem, size = 0x1000, scoped, tag = 'output window, operand 1, single buffered']
    #allocation14 [shape = 's32[1]{0}', space=sflag, size = 0x4, scoped, tag = 'scoped memory for tpu_custom_call.1']
    #allocation15 [shape = 'u8[4096]{0}', space=vmem, size = 0x1000, scoped, tag = 'output window, operand 2, single buffered']
    %17 = vsyncpa [#allocation4], 0
    %18 = vsyncpa [#allocation7], 0
    %19 = vsyncpa [#allocation10], 0
    %20 = vsyncpa [#allocation5], 0
    %21 = vsyncpa [#allocation14], 0
    // Predicated region
    $region2: #{tpu_custom_call.1} parent=1 // pred_check
      _
    $region3: #{tpu_custom_call.1} parent=1 // pred_check_branch
      %23 = sbr.rel (0) target = $region5
    $region4: #{tpu_custom_call.1} parent=1 // pred_region
      %s25 = ssub.s32 128, 128
      %26 = vsyncadd [#allocation4], %s25
      %s28 = sshll.u32 [#allocation3], 4
      %s29 = int_to_ptr.vmem [resolvable:$true] %s28
      %31 = dma.hbm_to_vmem [thread:$0]  %s0, 128, %s29, [#allocation4]
    $region5: #{tpu_custom_call.1} parent=1 // pred_fallthru
      _
    // Predicated region
    $region6: #{tpu_custom_call.1} parent=1 // pred_check
      _
    $region7: #{tpu_custom_call.1} parent=1 // pred_check_branch
      %33 = sbr.rel (0) target = $region9
    $region8: #{tpu_custom_call.1} parent=1 // pred_region
      %s35 = ssub.s32 2048, 2048
      %36 = vsyncadd [#allocation7], %s35
      %s37 = sshll.u32 [#allocation6], 4
      %s38 = int_to_ptr.vmem [resolvable:$true] %s37
      %43 = dma.hbm_to_vmem [thread:$0]  %s1, 2048, %s38, [#allocation7], 128, 128, 8
    $region9: #{tpu_custom_call.1} parent=1 // pred_fallthru
      _
    // Predicated region
    $region10: #{tpu_custom_call.1} parent=1 // pred_check
      _
    $region11: #{tpu_custom_call.1} parent=1 // pred_check_branch
      %45 = sbr.rel (0) target = $region13
    $region12: #{tpu_custom_call.1} parent=1 // pred_region
      _
    $region13: #{tpu_custom_call.1} parent=1 // pred_fallthru
      _
    // Predicated region
    $region14: #{tpu_custom_call.1} parent=1 // pred_check
      _
    $region15: #{tpu_custom_call.1} parent=1 // pred_check_branch
      %47 = sbr.rel (0) target = $region17
    $region16: #{tpu_custom_call.1} parent=1 // pred_region
      %s49 = ssub.s32 2048, 2048
      %50 = vsyncadd [#allocation7], %s49
      %s51 = sshll.u32 [#allocation8], 4
      %s52 = int_to_ptr.vmem [resolvable:$true] %s51
      %57 = dma.hbm_to_vmem [thread:$0]  %s3, 2048, %s52, [#allocation7], 128, 128, 8
    $region17: #{tpu_custom_call.1} parent=1 // pred_fallthru
      _
    // Predicated region
    $region18: #{tpu_custom_call.1} parent=1 // pred_check
      _
    $region19: #{tpu_custom_call.1} parent=1 // pred_check_branch
      %59 = sbr.rel (0) target = $region21
    $region20: #{tpu_custom_call.1} parent=1 // pred_region
      _
    $region21: #{tpu_custom_call.1} parent=1 // pred_fallthru
      _
    // Predicated region
    $region22: #{tpu_custom_call.1} parent=1 // pred_check
      _
    $region23: #{tpu_custom_call.1} parent=1 // pred_check_branch
      %61 = sbr.rel (0) target = $region25
    $region24: #{tpu_custom_call.1} parent=1 // pred_region
      %s63 = ssub.s32 2048, 2048
      %64 = vsyncadd [#allocation10], %s63
      %s65 = sshll.u32 [#allocation9], 4
      %s66 = int_to_ptr.vmem [resolvable:$true] %s65
      %71 = dma.hbm_to_vmem [thread:$0]  %s5, 2048, %s66, [#allocation10], 128, 128, 8
    $region25: #{tpu_custom_call.1} parent=1 // pred_fallthru
      _
    // Predicated region
    $region26: #{tpu_custom_call.1} parent=1 // pred_check
      _
    $region27: #{tpu_custom_call.1} parent=1 // pred_check_branch
      %73 = sbr.rel (0) target = $region29
    $region28: #{tpu_custom_call.1} parent=1 // pred_region
      _
    $region29: #{tpu_custom_call.1} parent=1 // pred_fallthru
      _
    // Predicated region
    $region30: #{tpu_custom_call.1} parent=1 // pred_check
      _
    $region31: #{tpu_custom_call.1} parent=1 // pred_check_branch
      %75 = sbr.rel (0) target = $region33
    $region32: #{tpu_custom_call.1} parent=1 // pred_region
      %s77 = ssub.s32 2048, 2048
      %78 = vsyncadd [#allocation10], %s77
      %s79 = sshll.u32 [#allocation11], 4
      %s80 = int_to_ptr.vmem [resolvable:$true] %s79
      %85 = dma.hbm_to_vmem [thread:$0]  %s7, 2048, %s80, [#allocation10], 128, 128, 8
    $region33: #{tpu_custom_call.1} parent=1 // pred_fallthru
      _
    // Predicated region
    $region34: #{tpu_custom_call.1} parent=1 // pred_check
      _
    $region35: #{tpu_custom_call.1} parent=1 // pred_check_branch
      %87 = sbr.rel (0) target = $region37
    $region36: #{tpu_custom_call.1} parent=1 // pred_region
      _
    $region37: #{tpu_custom_call.1} parent=1 // pred_fallthru
      _
    // Predicated region
    $region38: #{tpu_custom_call.1} parent=1 // pred_check
      _
    $region39: #{tpu_custom_call.1} parent=1 // pred_check_branch
      %89 = sbr.rel (0) target = $region41
    $region40: #{tpu_custom_call.1} parent=1 // pred_region
      %90 = dma.done [#allocation4], 128
    $region41: #{tpu_custom_call.1} parent=1 // pred_fallthru
      _
    // Predicated region
    $region42: #{tpu_custom_call.1} parent=1 // pred_check
      _
    $region43: #{tpu_custom_call.1} parent=1 // pred_check_branch
      %92 = sbr.rel (0) target = $region45
    $region44: #{tpu_custom_call.1} parent=1 // pred_region
      %93 = dma.done [#allocation7], 2048
    $region45: #{tpu_custom_call.1} parent=1 // pred_fallthru
      _
    // Predicated region
    $region46: #{tpu_custom_call.1} parent=1 // pred_check
      _
    $region47: #{tpu_custom_call.1} parent=1 // pred_check_branch
      %95 = sbr.rel (0) target = $region49
    $region48: #{tpu_custom_call.1} parent=1 // pred_region
      %96 = dma.done [#allocation7], 2048
    $region49: #{tpu_custom_call.1} parent=1 // pred_fallthru
      _
    // Predicated region
    $region50: #{tpu_custom_call.1} parent=1 // pred_check
      _
    $region51: #{tpu_custom_call.1} parent=1 // pred_check_branch
      %98 = sbr.rel (0) target = $region53
    $region52: #{tpu_custom_call.1} parent=1 // pred_region
      %99 = dma.done [#allocation10], 2048
    $region53: #{tpu_custom_call.1} parent=1 // pred_fallthru
      _
    // Predicated region
    $region54: #{tpu_custom_call.1} parent=1 // pred_check
      _
    $region55: #{tpu_custom_call.1} parent=1 // pred_check_branch
      %101 = sbr.rel (0) target = $region57
    $region56: #{tpu_custom_call.1} parent=1 // pred_region
      %102 = dma.done [#allocation10], 2048
    $region57: #{tpu_custom_call.1} parent=1 // pred_fallthru
      _
    %p103 = scmp.eq.s32.totalorder 0, 0
    // Predicated region
    $region58: #{tpu_custom_call.1} parent=1 // pred_check
      %p104 = pneg %p103
    $region59: #{tpu_custom_call.1} parent=1 // pred_check_branch
      %106 = sbr.rel (%p104) target = $region61
    $region60: #{tpu_custom_call.1} parent=1 // pred_region
      %107 = vst [vmem:[#allocation2] sm:$0xff] 0.0
    $region61: #{tpu_custom_call.1} parent=1 // pred_fallthru
      _
    %v108 = vld [vmem:[#allocation2] sm:$0xff]
    %v109 = vld [vmem:[#allocation3] sm:$0xff]
    %v110 = vld [vmem:[#allocation6] sm:$0xff]
    %v111 = vld [vmem:[#allocation6 + $0x8] sm:$0xff]
    %v112 = vld [vmem:[#allocation6 + $0x10] sm:$0xff]
    %v113 = vld [vmem:[#allocation6 + $0x18] sm:$0xff]
    %v114 = vld [vmem:[#allocation6 + $0x20] sm:$0xff]
    %v115 = vld [vmem:[#allocation6 + $0x28] sm:$0xff]
    %v116 = vld [vmem:[#allocation6 + $0x30] sm:$0xff]
    %v117 = vld [vmem:[#allocation6 + $0x38] sm:$0xff]
    %v118 = vld [vmem:[#allocation6 + $0x40] sm:$0xff]
    %v119 = vld [vmem:[#allocation6 + $0x48] sm:$0xff]
    %v120 = vld [vmem:[#allocation6 + $0x50] sm:$0xff]
    %v121 = vld [vmem:[#allocation6 + $0x58] sm:$0xff]
    %v122 = vld [vmem:[#allocation6 + $0x60] sm:$0xff]
    %v123 = vld [vmem:[#allocation6 + $0x68] sm:$0xff]
    %v124 = vld [vmem:[#allocation6 + $0x70] sm:$0xff]
    %v125 = vld [vmem:[#allocation6 + $0x78] sm:$0xff]
    %126 = vmatprep.subr.mxu0 0.0
    %127 = vmatpush1.msra.mxu0 %v110
    %128 = vmatprep.subr.mxu0 0.0
    %129 = vmatpush1.msra.mxu0 %v111
    %130 = vmatprep.subr.mxu0 0.0
    %131 = vmatpush1.msra.mxu0 %v112
    %132 = vmatprep.subr.mxu0 0.0
    %133 = vmatpush1.msra.mxu0 %v113
    %134 = vmatprep.subr.mxu0 0.0
    %135 = vmatpush1.msra.mxu0 %v114
    %136 = vmatprep.subr.mxu0 0.0
    %137 = vmatpush1.msra.mxu0 %v115
    %138 = vmatprep.subr.mxu0 0.0
    %139 = vmatpush1.msra.mxu0 %v116
    %140 = vmatprep.subr.mxu0 0.0
    %141 = vmatpush1.msra.mxu0 %v117
    %142 = vmatprep.subr.mxu0 0.0
    %143 = vmatpush1.msra.mxu0 %v118
    %144 = vmatprep.subr.mxu0 0.0
    %145 = vmatpush1.msra.mxu0 %v119
    %146 = vmatprep.subr.mxu0 0.0
    %147 = vmatpush1.msra.mxu0 %v120
    %148 = vmatprep.subr.mxu0 0.0
    %149 = vmatpush1.msra.mxu0 %v121
    %150 = vmatprep.subr.mxu0 0.0
    %151 = vmatpush1.msra.mxu0 %v122
    %152 = vmatprep.subr.mxu0 0.0
    %153 = vmatpush1.msra.mxu0 %v123
    %154 = vmatprep.subr.mxu0 0.0
    %155 = vmatpush1.msra.mxu0 %v124
    %156 = vmatprep.subr.mxu0 0.0
    %157 = vmatpush1.msra.mxu0 %v125
    %158 = vmatprep.subr.mxu0 0.0
    %159 = vmatpush1.msra.mxu0 0.0
    %160 = vmatprep.subr.mxu0 0.0
    %161 = vmatpush1.msra.mxu0 0.0
    %162 = vmatprep.subr.mxu0 0.0
    %163 = vmatpush1.msra.mxu0 0.0
    %164 = vmatprep.subr.mxu0 0.0
    %165 = vmatpush1.msra.mxu0 0.0
    %166 = vmatprep.subr.mxu0 0.0
    %167 = vmatpush1.msra.mxu0 0.0
    %168 = vmatprep.subr.mxu0 0.0
    %169 = vmatpush1.msra.mxu0 0.0
    %170 = vmatprep.subr.mxu0 0.0
    %171 = vmatpush1.msra.mxu0 0.0
    %172 = vmatprep.subr.mxu0 0.0
    %173 = vmatpush1.msra.mxu0 0.0
    %174 = vmatprep.subr.mxu0 0.0
    %175 = vmatpush1.msra.mxu0 0.0
    %176 = vmatprep.subr.mxu0 0.0
    %177 = vmatpush1.msra.mxu0 0.0
    %178 = vmatprep.subr.mxu0 0.0
    %179 = vmatpush1.msra.mxu0 0.0
    %180 = vmatprep.subr.mxu0 0.0
    %181 = vmatpush1.msra.mxu0 0.0
    %182 = vmatprep.subr.mxu0 0.0
    %183 = vmatpush1.msra.mxu0 0.0
    %184 = vmatprep.subr.mxu0 0.0
    %185 = vmatpush1.msra.mxu0 0.0
    %186 = vmatprep.subr.mxu0 0.0
    %187 = vmatpush1.msra.mxu0 0.0
    %188 = vmatprep.subr.mxu0 0.0
    %189 = vmatpush1.msra.mxu0 0.0
    %190 = vmatprep.mubr.f32.mxu0 0.0
    %191 = vmatmul.mubr.f32.gmra.mrb[0].mxu0 %v109
    %v192 = vpop.f32.mrb[0].mxu0
    %v193 = vadd.f32 0.0, %v192
    %v194 = vpop.f32.mrb[0].mxu0
    %195 = vdwg.mxu0
    %v196 = vadd.f32 %v108, %v193
    %197 = vst [vmem:[#allocation2] sm:$0xff] %v196
    // Predicated region
    $region62: #{tpu_custom_call.1} parent=1 // pred_check
      %p198 = pneg %p103
    $region63: #{tpu_custom_call.1} parent=1 // pred_check_branch
      %200 = sbr.rel (%p198) target = $region65
    $region64: #{tpu_custom_call.1} parent=1 // pred_region
      %v201 = vld [vmem:[#allocation2] sm:$0xff]
      %v202 = vld [vmem:[%s2] sm:$0x1]
      %v204 = vlaneseq
      %v205 = vshrl.u32 %v204, 7
      %v206 = vsub.s32 0, %v205
      %v207 = vrot.slane %v202, %v206
      %v209 = vadd.f32 %v201, %v207
      %v210 = vtanh.pop %v209
      %v211 = vld [vmem:[#allocation8] sm:$0xff]
      %v212 = vld [vmem:[#allocation8 + $0x8] sm:$0xff]
      %v213 = vld [vmem:[#allocation8 + $0x10] sm:$0xff]
      %v214 = vld [vmem:[#allocation8 + $0x18] sm:$0xff]
      %v215 = vld [vmem:[#allocation8 + $0x20] sm:$0xff]
      %v216 = vld [vmem:[#allocation8 + $0x28] sm:$0xff]
      %v217 = vld [vmem:[#allocation8 + $0x30] sm:$0xff]
      %v218 = vld [vmem:[#allocation8 + $0x38] sm:$0xff]
      %v219 = vld [vmem:[#allocation8 + $0x40] sm:$0xff]
      %v220 = vld [vmem:[#allocation8 + $0x48] sm:$0xff]
      %v221 = vld [vmem:[#allocation8 + $0x50] sm:$0xff]
      %v222 = vld [vmem:[#allocation8 + $0x58] sm:$0xff]
      %v223 = vld [vmem:[#allocation8 + $0x60] sm:$0xff]
      %v224 = vld [vmem:[#allocation8 + $0x68] sm:$0xff]
      %v225 = vld [vmem:[#allocation8 + $0x70] sm:$0xff]
      %v226 = vld [vmem:[#allocation8 + $0x78] sm:$0xff]
      %v227 = vld [vmem:[%s4] sm:$0x1]
      %v229 = vlaneseq
      %v230 = vshrl.u32 %v229, 7
      %v231 = vsub.s32 0, %v230
      %v232 = vrot.slane %v227, %v231
      %234 = vmatprep.subr.mxu0 0.0
      %235 = vmatpush1.msra.mxu0 %v211
      %236 = vmatprep.subr.mxu0 0.0
      %237 = vmatpush1.msra.mxu0 %v212
      %238 = vmatprep.subr.mxu0 0.0
      %239 = vmatpush1.msra.mxu0 %v213
      %240 = vmatprep.subr.mxu0 0.0
      %241 = vmatpush1.msra.mxu0 %v214
      %242 = vmatprep.subr.mxu0 0.0
      %243 = vmatpush1.msra.mxu0 %v215
      %244 = vmatprep.subr.mxu0 0.0
      %245 = vmatpush1.msra.mxu0 %v216
      %246 = vmatprep.subr.mxu0 0.0
      %247 = vmatpush1.msra.mxu0 %v217
      %248 = vmatprep.subr.mxu0 0.0
      %249 = vmatpush1.msra.mxu0 %v218
      %250 = vmatprep.subr.mxu0 0.0
      %251 = vmatpush1.msra.mxu0 %v219
      %252 = vmatprep.subr.mxu0 0.0
      %253 = vmatpush1.msra.mxu0 %v220
      %254 = vmatprep.subr.mxu0 0.0
      %255 = vmatpush1.msra.mxu0 %v221
      %256 = vmatprep.subr.mxu0 0.0
      %257 = vmatpush1.msra.mxu0 %v222
      %258 = vmatprep.subr.mxu0 0.0
      %259 = vmatpush1.msra.mxu0 %v223
      %260 = vmatprep.subr.mxu0 0.0
      %261 = vmatpush1.msra.mxu0 %v224
      %262 = vmatprep.subr.mxu0 0.0
      %263 = vmatpush1.msra.mxu0 %v225
      %264 = vmatprep.subr.mxu0 0.0
      %265 = vmatpush1.msra.mxu0 %v226
      %266 = vmatprep.subr.mxu0 0.0
      %267 = vmatpush1.msra.mxu0 0.0
      %268 = vmatprep.subr.mxu0 0.0
      %269 = vmatpush1.msra.mxu0 0.0
      %270 = vmatprep.subr.mxu0 0.0
      %271 = vmatpush1.msra.mxu0 0.0
      %272 = vmatprep.subr.mxu0 0.0
      %273 = vmatpush1.msra.mxu0 0.0
      %274 = vmatprep.subr.mxu0 0.0
      %275 = vmatpush1.msra.mxu0 0.0
      %276 = vmatprep.subr.mxu0 0.0
      %277 = vmatpush1.msra.mxu0 0.0
      %278 = vmatprep.subr.mxu0 0.0
      %279 = vmatpush1.msra.mxu0 0.0
      %280 = vmatprep.subr.mxu0 0.0
      %281 = vmatpush1.msra.mxu0 0.0
      %282 = vmatprep.subr.mxu0 0.0
      %283 = vmatpush1.msra.mxu0 0.0
      %284 = vmatprep.subr.mxu0 0.0
      %285 = vmatpush1.msra.mxu0 0.0
      %286 = vmatprep.subr.mxu0 0.0
      %287 = vmatpush1.msra.mxu0 0.0
      %288 = vmatprep.subr.mxu0 0.0
      %289 = vmatpush1.msra.mxu0 0.0
      %290 = vmatprep.subr.mxu0 0.0
      %291 = vmatpush1.msra.mxu0 0.0
      %292 = vmatprep.subr.mxu0 0.0
      %293 = vmatpush1.msra.mxu0 0.0
      %294 = vmatprep.subr.mxu0 0.0
      %295 = vmatpush1.msra.mxu0 0.0
      %296 = vmatprep.subr.mxu0 0.0
      %297 = vmatpush1.msra.mxu0 0.0
      %298 = vmatprep.mubr.f32.mxu0 0.0
      %299 = vmatmul.mubr.f32.gmra.mrb[0].mxu0 %v210
      %v300 = vpop.f32.mrb[0].mxu0
      %v301 = vadd.f32 %v232, %v300
      %v302 = vpop.f32.mrb[0].mxu0
      %303 = vdwg.mxu0
      %v304 = vld [vmem:[#allocation9] sm:$0xff]
      %v305 = vld [vmem:[#allocation9 + $0x8] sm:$0xff]
      %v306 = vld [vmem:[#allocation9 + $0x10] sm:$0xff]
      %v307 = vld [vmem:[#allocation9 + $0x18] sm:$0xff]
      %v308 = vld [vmem:[#allocation9 + $0x20] sm:$0xff]
      %v309 = vld [vmem:[#allocation9 + $0x28] sm:$0xff]
      %v310 = vld [vmem:[#allocation9 + $0x30] sm:$0xff]
      %v311 = vld [vmem:[#allocation9 + $0x38] sm:$0xff]
      %v312 = vld [vmem:[#allocation9 + $0x40] sm:$0xff]
      %v313 = vld [vmem:[#allocation9 + $0x48] sm:$0xff]
      %v314 = vld [vmem:[#allocation9 + $0x50] sm:$0xff]
      %v315 = vld [vmem:[#allocation9 + $0x58] sm:$0xff]
      %v316 = vld [vmem:[#allocation9 + $0x60] sm:$0xff]
      %v317 = vld [vmem:[#allocation9 + $0x68] sm:$0xff]
      %v318 = vld [vmem:[#allocation9 + $0x70] sm:$0xff]
      %v319 = vld [vmem:[#allocation9 + $0x78] sm:$0xff]
      %v320 = vld [vmem:[%s6] sm:$0x1]
      %v322 = vlaneseq
      %v323 = vshrl.u32 %v322, 7
      %v324 = vsub.s32 0, %v323
      %v325 = vrot.slane %v320, %v324
      %327 = vmatprep.subr.mxu0 0.0
      %328 = vmatpush1.msra.mxu0 %v304
      %329 = vmatprep.subr.mxu0 0.0
      %330 = vmatpush1.msra.mxu0 %v305
      %331 = vmatprep.subr.mxu0 0.0
      %332 = vmatpush1.msra.mxu0 %v306
      %333 = vmatprep.subr.mxu0 0.0
      %334 = vmatpush1.msra.mxu0 %v307
      %335 = vmatprep.subr.mxu0 0.0
      %336 = vmatpush1.msra.mxu0 %v308
      %337 = vmatprep.subr.mxu0 0.0
      %338 = vmatpush1.msra.mxu0 %v309
      %339 = vmatprep.subr.mxu0 0.0
      %340 = vmatpush1.msra.mxu0 %v310
      %341 = vmatprep.subr.mxu0 0.0
      %342 = vmatpush1.msra.mxu0 %v311
      %343 = vmatprep.subr.mxu0 0.0
      %344 = vmatpush1.msra.mxu0 %v312
      %345 = vmatprep.subr.mxu0 0.0
      %346 = vmatpush1.msra.mxu0 %v313
      %347 = vmatprep.subr.mxu0 0.0
      %348 = vmatpush1.msra.mxu0 %v314
      %349 = vmatprep.subr.mxu0 0.0
      %350 = vmatpush1.msra.mxu0 %v315
      %351 = vmatprep.subr.mxu0 0.0
      %352 = vmatpush1.msra.mxu0 %v316
      %353 = vmatprep.subr.mxu0 0.0
      %354 = vmatpush1.msra.mxu0 %v317
      %355 = vmatprep.subr.mxu0 0.0
      %356 = vmatpush1.msra.mxu0 %v318
      %357 = vmatprep.subr.mxu0 0.0
      %358 = vmatpush1.msra.mxu0 %v319
      %359 = vmatprep.subr.mxu0 0.0
      %360 = vmatpush1.msra.mxu0 0.0
      %361 = vmatprep.subr.mxu0 0.0
      %362 = vmatpush1.msra.mxu0 0.0
      %363 = vmatprep.subr.mxu0 0.0
      %364 = vmatpush1.msra.mxu0 0.0
      %365 = vmatprep.subr.mxu0 0.0
      %366 = vmatpush1.msra.mxu0 0.0
      %367 = vmatprep.subr.mxu0 0.0
      %368 = vmatpush1.msra.mxu0 0.0
      %369 = vmatprep.subr.mxu0 0.0
      %370 = vmatpush1.msra.mxu0 0.0
      %371 = vmatprep.subr.mxu0 0.0
      %372 = vmatpush1.msra.mxu0 0.0
      %373 = vmatprep.subr.mxu0 0.0
      %374 = vmatpush1.msra.mxu0 0.0
      %375 = vmatprep.subr.mxu0 0.0
      %376 = vmatpush1.msra.mxu0 0.0
      %377 = vmatprep.subr.mxu0 0.0
      %378 = vmatpush1.msra.mxu0 0.0
      %379 = vmatprep.subr.mxu0 0.0
      %380 = vmatpush1.msra.mxu0 0.0
      %381 = vmatprep.subr.mxu0 0.0
      %382 = vmatpush1.msra.mxu0 0.0
      %383 = vmatprep.subr.mxu0 0.0
      %384 = vmatpush1.msra.mxu0 0.0
      %385 = vmatprep.subr.mxu0 0.0
      %386 = vmatpush1.msra.mxu0 0.0
      %387 = vmatprep.subr.mxu0 0.0
      %388 = vmatpush1.msra.mxu0 0.0
      %389 = vmatprep.subr.mxu0 0.0
      %390 = vmatpush1.msra.mxu0 0.0
      %391 = vmatprep.mubr.f32.mxu0 0.0
      %392 = vmatmul.mubr.f32.gmra.mrb[0].mxu0 %v210
      %v393 = vpop.f32.mrb[0].mxu0
      %v394 = vadd.f32 %v325, %v393
      %v395 = vpop.f32.mrb[0].mxu0
      %396 = vdwg.mxu0
      %397 = vst [vmem:[#allocation12] sm:$0xff] %v301
      %398 = vst [vmem:[#allocation13] sm:$0xff] %v394
      %v399 = vld [vmem:[#allocation11] sm:$0xff]
      %v400 = vld [vmem:[#allocation11 + $0x8] sm:$0xff]
      %v401 = vld [vmem:[#allocation11 + $0x10] sm:$0xff]
      %v402 = vld [vmem:[#allocation11 + $0x18] sm:$0xff]
      %v403 = vld [vmem:[#allocation11 + $0x20] sm:$0xff]
      %v404 = vld [vmem:[#allocation11 + $0x28] sm:$0xff]
      %v405 = vld [vmem:[#allocation11 + $0x30] sm:$0xff]
      %v406 = vld [vmem:[#allocation11 + $0x38] sm:$0xff]
      %v407 = vld [vmem:[#allocation11 + $0x40] sm:$0xff]
      %v408 = vld [vmem:[#allocation11 + $0x48] sm:$0xff]
      %v409 = vld [vmem:[#allocation11 + $0x50] sm:$0xff]
      %v410 = vld [vmem:[#allocation11 + $0x58] sm:$0xff]
      %v411 = vld [vmem:[#allocation11 + $0x60] sm:$0xff]
      %v412 = vld [vmem:[#allocation11 + $0x68] sm:$0xff]
      %v413 = vld [vmem:[#allocation11 + $0x70] sm:$0xff]
      %v414 = vld [vmem:[#allocation11 + $0x78] sm:$0xff]
      %v415 = vld [vmem:[%s8] sm:$0x1]
      %v417 = vlaneseq
      %v418 = vshrl.u32 %v417, 7
      %v419 = vsub.s32 0, %v418
      %v420 = vrot.slane %v415, %v419
      %422 = vmatprep.subr.mxu0 0.0
      %423 = vmatpush1.msra.mxu0 %v399
      %424 = vmatprep.subr.mxu0 0.0
      %425 = vmatpush1.msra.mxu0 %v400
      %426 = vmatprep.subr.mxu0 0.0
      %427 = vmatpush1.msra.mxu0 %v401
      %428 = vmatprep.subr.mxu0 0.0
      %429 = vmatpush1.msra.mxu0 %v402
      %430 = vmatprep.subr.mxu0 0.0
      %431 = vmatpush1.msra.mxu0 %v403
      %432 = vmatprep.subr.mxu0 0.0
      %433 = vmatpush1.msra.mxu0 %v404
      %434 = vmatprep.subr.mxu0 0.0
      %435 = vmatpush1.msra.mxu0 %v405
      %436 = vmatprep.subr.mxu0 0.0
      %437 = vmatpush1.msra.mxu0 %v406
      %438 = vmatprep.subr.mxu0 0.0
      %439 = vmatpush1.msra.mxu0 %v407
      %440 = vmatprep.subr.mxu0 0.0
      %441 = vmatpush1.msra.mxu0 %v408
      %442 = vmatprep.subr.mxu0 0.0
      %443 = vmatpush1.msra.mxu0 %v409
      %444 = vmatprep.subr.mxu0 0.0
      %445 = vmatpush1.msra.mxu0 %v410
      %446 = vmatprep.subr.mxu0 0.0
      %447 = vmatpush1.msra.mxu0 %v411
      %448 = vmatprep.subr.mxu0 0.0
      %449 = vmatpush1.msra.mxu0 %v412
      %450 = vmatprep.subr.mxu0 0.0
      %451 = vmatpush1.msra.mxu0 %v413
      %452 = vmatprep.subr.mxu0 0.0
      %453 = vmatpush1.msra.mxu0 %v414
      %454 = vmatprep.subr.mxu0 0.0
      %455 = vmatpush1.msra.mxu0 0.0
      %456 = vmatprep.subr.mxu0 0.0
      %457 = vmatpush1.msra.mxu0 0.0
      %458 = vmatprep.subr.mxu0 0.0
      %459 = vmatpush1.msra.mxu0 0.0
      %460 = vmatprep.subr.mxu0 0.0
      %461 = vmatpush1.msra.mxu0 0.0
      %462 = vmatprep.subr.mxu0 0.0
      %463 = vmatpush1.msra.mxu0 0.0
      %464 = vmatprep.subr.mxu0 0.0
      %465 = vmatpush1.msra.mxu0 0.0
      %466 = vmatprep.subr.mxu0 0.0
      %467 = vmatpush1.msra.mxu0 0.0
      %468 = vmatprep.subr.mxu0 0.0
      %469 = vmatpush1.msra.mxu0 0.0
      %470 = vmatprep.subr.mxu0 0.0
      %471 = vmatpush1.msra.mxu0 0.0
      %472 = vmatprep.subr.mxu0 0.0
      %473 = vmatpush1.msra.mxu0 0.0
      %474 = vmatprep.subr.mxu0 0.0
      %475 = vmatpush1.msra.mxu0 0.0
      %476 = vmatprep.subr.mxu0 0.0
      %477 = vmatpush1.msra.mxu0 0.0
      %478 = vmatprep.subr.mxu0 0.0
      %479 = vmatpush1.msra.mxu0 0.0
      %480 = vmatprep.subr.mxu0 0.0
      %481 = vmatpush1.msra.mxu0 0.0
      %482 = vmatprep.subr.mxu0 0.0
      %483 = vmatpush1.msra.mxu0 0.0
      %484 = vmatprep.subr.mxu0 0.0
      %485 = vmatpush1.msra.mxu0 0.0
      %486 = vmatprep.mubr.f32.mxu0 0.0
      %487 = vmatmul.mubr.f32.gmra.mrb[0].mxu0 %v301
      %v488 = vpop.f32.mrb[0].mxu0
      %v489 = vadd.f32 %v420, %v488
      %v490 = vpop.f32.mrb[0].mxu0
      %491 = vdwg.mxu0
      %v492 = vtanh.pop %v489
      %493 = vst [vmem:[#allocation15] sm:$0xff] %v492
    $region65: #{tpu_custom_call.1} parent=1 // pred_fallthru
      _
    // Predicated region
    $region66: #{tpu_custom_call.1} parent=1 // pred_check
      _
    $region67: #{tpu_custom_call.1} parent=1 // pred_check_branch
      %495 = sbr.rel (0) target = $region69
    $region68: #{tpu_custom_call.1} parent=1 // pred_region
      %s497 = ssub.s32 128, 128
      %498 = vsyncadd [#allocation5], %s497
      %s500 = sshll.u32 [#allocation12], 4
      %s501 = int_to_ptr.vmem [resolvable:$true] %s500
      %503 = dma.vmem_to_hbm [thread:$0]  %s501, 128, %s9, [#allocation5]
    $region69: #{tpu_custom_call.1} parent=1 // pred_fallthru
      _
    // Predicated region
    $region70: #{tpu_custom_call.1} parent=1 // pred_check
      _
    $region71: #{tpu_custom_call.1} parent=1 // pred_check_branch
      %505 = sbr.rel (0) target = $region73
    $region72: #{tpu_custom_call.1} parent=1 // pred_region
      %s507 = ssub.s32 128, 128
      %508 = vsyncadd [#allocation14], %s507
      %s510 = sshll.u32 [#allocation13], 4
      %s511 = int_to_ptr.vmem [resolvable:$true] %s510
      %513 = dma.vmem_to_hbm [thread:$0]  %s511, 128, %s10, [#allocation14]
    $region73: #{tpu_custom_call.1} parent=1 // pred_fallthru
      _
    // Predicated region
    $region74: #{tpu_custom_call.1} parent=1 // pred_check
      _
    $region75: #{tpu_custom_call.1} parent=1 // pred_check_branch
      %515 = sbr.rel (0) target = $region77
    $region76: #{tpu_custom_call.1} parent=1 // pred_region
      %s517 = ssub.s32 128, 128
      %518 = vsyncadd [#allocation14], %s517
      %s520 = sshll.u32 [#allocation15], 4
      %s521 = int_to_ptr.vmem [resolvable:$true] %s520
      %523 = dma.vmem_to_hbm [thread:$0]  %s521, 128, %s11, [#allocation14]
    $region77: #{tpu_custom_call.1} parent=1 // pred_fallthru
      _
    // Predicated region
    $region78: #{tpu_custom_call.1} parent=1 // pred_check
      _
    $region79: #{tpu_custom_call.1} parent=1 // pred_check_branch
      %525 = sbr.rel (0) target = $region81
    $region80: #{tpu_custom_call.1} parent=1 // pred_region
      %526 = dma.done [#allocation5], 128
    $region81: #{tpu_custom_call.1} parent=1 // pred_fallthru
      _
    // Predicated region
    $region82: #{tpu_custom_call.1} parent=1 // pred_check
      _
    $region83: #{tpu_custom_call.1} parent=1 // pred_check_branch
      %528 = sbr.rel (0) target = $region85
    $region84: #{tpu_custom_call.1} parent=1 // pred_region
      %529 = dma.done [#allocation14], 128
    $region85: #{tpu_custom_call.1} parent=1 // pred_fallthru
      _
    // Predicated region
    $region86: #{tpu_custom_call.1} parent=1 // pred_check
      _
    $region87: #{tpu_custom_call.1} parent=1 // pred_check_branch
      %531 = sbr.rel (0) target = $region89
    $region88: #{tpu_custom_call.1} parent=1 // pred_region
      %532 = dma.done [#allocation14], 128
    $region89: #{tpu_custom_call.1} parent=1 // pred_fallthru
      _
    %533 = vsyncpa [#allocation4], 1
    %534 = vsyncpa [#allocation7], 1
    %535 = vsyncpa [#allocation10], 1
    %536 = vsyncpa [#allocation5], 1
    %537 = vsyncpa [#allocation14], 1

</llo_original>
